<compile_context>
chip_gen: v6e
topology: v6e:2x2x1
jax: 0.10.0
libtpu: 0.0.40
codegen_flags: <defaults>
</compile_context>

<pallas_src>
import functools

import jax
import jax.numpy as jnp
from jax import lax
from jax.experimental import pallas as pl
from jax.experimental.pallas import tpu as pltpu

_LANE = 128
_MAX_BLOCK_ROWS = 2048  # 2048 * 128 * 4B = 1 MiB per f32 buffer


# -------------------- kernels --------------------

def _l1_reduce_kernel(pred_ref, tgt_ref, out_ref, acc_ref, *,
                      rows, block_rows, steps_per_core):
    """Accumulate |pred - target| into a VMEM vector accumulator; reduce once."""
    p = pl.program_id(0)          # parallel (core) axis
    s = pl.program_id(1)          # reduction axis

    @pl.when(s == 0)
    def _():
        acc_ref[...] = jnp.zeros_like(acc_ref)

    d = jnp.abs(pred_ref[...].astype(jnp.float32)
                - tgt_ref[...].astype(jnp.float32))

    # Mask the ragged last block (only generated when rows % block_rows != 0).
    if rows % block_rows != 0:
        blk = p * steps_per_core + s
        row_ids = blk * block_rows + lax.broadcasted_iota(jnp.int32, d.shape, 0)
        d = jnp.where(row_ids < rows, d, 0.0)

    acc_ref[...] += d

    @pl.when(s == steps_per_core - 1)
    def _():
        out_ref[0, 0] = jnp.sum(acc_ref[...])


def _l1_elemwise_kernel(pred_ref, tgt_ref, out_ref, *, scale):
    """reduction='none': elementwise |pred - target| * loss_weight, native dtype."""
    d = jnp.abs(pred_ref[...] - tgt_ref[...])
    if scale != 1.0:
        d = d * jnp.asarray(scale, dtype=d.dtype)
    out_ref[...] = d.astype(out_ref.dtype)


# -------------------- wrappers --------------------

def _l1_none(pred, target, loss_weight):
    shape = pred.shape
    flat_p = pred.reshape(-1)
    flat_t = target.reshape(-1)
    n = flat_p.shape[0]

    rem = n % _LANE
    if rem:
        # Rare for NCHW tensors; small zero-pad so the slab is lane-dense.
        pad = _LANE - rem
        flat_p = jnp.concatenate([flat_p, jnp.zeros((pad,), flat_p.dtype)])
        flat_t = jnp.concatenate([flat_t, jnp.zeros((pad,), flat_t.dtype)])

    rows = flat_p.shape[0] // _LANE
    p2 = flat_p.reshape(rows, _LANE)
    t2 = flat_t.reshape(rows, _LANE)

    block_rows = min(rows, _MAX_BLOCK_ROWS)
    grid = (pl.cdiv(rows, block_rows),)

    itemsize = jnp.dtype(pred.dtype).itemsize
    cost = pl.CostEstimate(flops=3 * n, transcendentals=0,
                           bytes_accessed=3 * n * itemsize)

    kernel = functools.partial(_l1_elemwise_kernel, scale=float(loss_weight))
    out2 = pl.pallas_call(
        kernel,
        out_shape=jax.ShapeDtypeStruct((rows, _LANE), pred.dtype),
        grid_spec=pltpu.PrefetchScalarGridSpec(
            num_scalar_prefetch=0,
            grid=grid,
            in_specs=[
                pl.BlockSpec((block_rows, _LANE), lambda i: (i, 0)),
                pl.BlockSpec((block_rows, _LANE), lambda i: (i, 0)),
            ],
            out_specs=pl.BlockSpec((block_rows, _LANE), lambda i: (i, 0)),
        ),
        compiler_params=pltpu.CompilerParams(
            dimension_semantics=("parallel",)),
        cost_estimate=cost,
    )(p2, t2)

    return out2.reshape(-1)[:n].reshape(shape)


def _l1_reduce(pred, target, loss_weight, reduction):
    flat_p = pred.reshape(-1)
    flat_t = target.reshape(-1)
    n = flat_p.shape[0]

    scale = float(loss_weight) / n if reduction == 'mean' else float(loss_weight)

    rem = n % _LANE
    n_main = n - rem

    # Tail (< 128 elems) is summed in plain JAX — avoids a full-tensor pad copy.
    tail_sum = jnp.float32(0.0)
    if rem:
        tail_sum = jnp.sum(jnp.abs(flat_p[n_main:].astype(jnp.float32)
                                   - flat_t[n_main:].astype(jnp.float32)))

    if n_main == 0:
        return (tail_sum * jnp.float32(scale)).astype(pred.dtype)

    rows = n_main // _LANE
    if rem:
        p2 = flat_p[:n_main].reshape(rows, _LANE)
        t2 = flat_t[:n_main].reshape(rows, _LANE)
    else:
        p2 = flat_p.reshape(rows, _LANE)
        t2 = flat_t.reshape(rows, _LANE)

    block_rows = min(rows, _MAX_BLOCK_ROWS)
    num_blocks = pl.cdiv(rows, block_rows)
    # 2-way parallel leading axis (uses both TensorCores on v7x) when it splits
    # evenly; otherwise a single serial stream.
    n_par = 2 if (num_blocks >= 2 and num_blocks % 2 == 0) else 1
    steps_per_core = num_blocks // n_par

    itemsize = jnp.dtype(pred.dtype).itemsize
    cost = pl.CostEstimate(flops=3 * n_main, transcendentals=0,
                           bytes_accessed=2 * n_main * itemsize)

    kernel = functools.partial(
        _l1_reduce_kernel,
        rows=rows, block_rows=block_rows, steps_per_core=steps_per_core)

    partials = pl.pallas_call(
        kernel,
        out_shape=jax.ShapeDtypeStruct((n_par, 1), jnp.float32),
        grid_spec=pltpu.PrefetchScalarGridSpec(
            num_scalar_prefetch=0,
            grid=(n_par, steps_per_core),
            in_specs=[
                pl.BlockSpec((block_rows, _LANE),
                             lambda p, s: (p * steps_per_core + s, 0)),
                pl.BlockSpec((block_rows, _LANE),
                             lambda p, s: (p * steps_per_core + s, 0)),
            ],
            out_specs=pl.BlockSpec((1, 1), lambda p, s: (p, 0),
                                   memory_space=pltpu.SMEM),
            scratch_shapes=[pltpu.VMEM((block_rows, _LANE), jnp.float32)],
        ),
        compiler_params=pltpu.CompilerParams(
            dimension_semantics=("parallel", "arbitrary")),
        cost_estimate=cost,
    )(p2, t2)

    total = jnp.sum(partials) + tail_sum
    return (total * jnp.float32(scale)).astype(pred.dtype)


def l1_loss_pallas(pred, target, loss_weight=1.0, reduction='mean'):
    """Pallas implementation of L1Loss.forward(pred, target).

    pred, target: same-shape arrays (e.g. NCHW).  Returns a scalar for
    'mean'/'sum' (in pred.dtype) and an array of pred.shape for 'none'.
    """
    if reduction not in ('none', 'mean', 'sum'):
        raise ValueError(f'Unsupported reduction mode: {reduction}')
    assert pred.shape == target.shape, (pred.shape, target.shape)

    if reduction == 'none':
        return _l1_none(pred, target, loss_weight)
    return _l1_reduce(pred, target, loss_weight, reduction)


# -------------------- demo / test --------------------

if __name__ == "__main__":
    key = jax.random.PRNGKey(0)
    k1, k2, k3, k4, k5, k6 = jax.random.split(key, 6)

    loss_weight = 1.0

    # Small NCHW shapes consistent with the module docstring.
    N, C, H, W = 2, 4, 16, 16
    pred = jax.random.normal(k1, (N, C, H, W), dtype=jnp.float32)
    target = jax.random.normal(k2, (N, C, H, W), dtype=jnp.float32)

    loss_mean = jax.block_until_ready(
        l1_loss_pallas(pred, target, loss_weight=loss_weight, reduction='mean'))
    ref_mean = loss_weight * jnp.mean(jnp.abs(pred - target))

    loss_sum = jax.block_until_ready(
        l1_loss_pallas(pred, target, loss_weight=loss_weight, reduction='sum'))
    ref_sum = loss_weight * jnp.sum(jnp.abs(pred - target))

    loss_none = jax.block_until_ready(
        l1_loss_pallas(pred, target, loss_weight=loss_weight, reduction='none'))
    ref_none = loss_weight * jnp.abs(pred - target)

    assert jnp.allclose(loss_mean, ref_mean, rtol=1e-5, atol=1e-6), (loss_mean, ref_mean)
    assert jnp.allclose(loss_sum, ref_sum, rtol=1e-5, atol=1e-4), (loss_sum, ref_sum)
    assert jnp.allclose(loss_none, ref_none, rtol=1e-6, atol=1e-6)

    # Ragged shape: exercises the JAX-tail path (n % 128 != 0) and 'none' padding.
    pr = jax.random.normal(k3, (2, 3, 7, 5), dtype=jnp.float32)
    tr = jax.random.normal(k4, (2, 3, 7, 5), dtype=jnp.float32)
    lm = jax.block_until_ready(l1_loss_pallas(pr, tr, reduction='mean'))
    ln = jax.block_until_ready(l1_loss_pallas(pr, tr, reduction='none'))
    assert jnp.allclose(lm, jnp.mean(jnp.abs(pr - tr)), rtol=1e-5, atol=1e-6)
    assert jnp.allclose(ln, jnp.abs(pr - tr), rtol=1e-6, atol=1e-6)

    # Larger shape: exercises multi-block grid, 2-way parallel split and the
    # ragged-last-block mask inside the reduce kernel.
    pb = jax.random.normal(k5, (1, 8, 256, 144), dtype=jnp.float32)
    tb = jax.random.normal(k6, (1, 8, 256, 144), dtype=jnp.float32)
    ls = jax.block_until_ready(l1_loss_pallas(pb, tb, reduction='sum'))
    lmb = jax.block_until_ready(l1_loss_pallas(pb, tb, reduction='mean'))
    assert jnp.allclose(ls, jnp.sum(jnp.abs(pb - tb)), rtol=1e-5, atol=1e-1), ls
    assert jnp.allclose(lmb, jnp.mean(jnp.abs(pb - tb)), rtol=1e-5, atol=1e-6), lmb

    print("KERNEL_OK")
</pallas_src>

<mosaic_0001>
module attributes {stable_mosaic.version = 11 : i64} {
  func.func @_l1_reduce_kernel(%arg0: i32, %arg1: i32, %arg2: memref<16x128xf32, #tpu.memory_space<vmem>>, %arg3: memref<16x128xf32, #tpu.memory_space<vmem>>, %arg4: memref<1x1xf32, #tpu.memory_space<smem>>, %arg5: memref<16x128xf32, #tpu.memory_space<vmem>>) attributes {dimension_semantics = [#tpu.dimension_semantics<parallel>, #tpu.dimension_semantics<arbitrary>], iteration_bounds = array<i64: 1, 1>, scalar_prefetch = 0 : i64, scratch_operands = 1 : i64, tpu.core_type = #tpu.core_type<tc>, window_params = [{transform_indices = @transform_0, window_bounds = array<i64: 16, 128>}, {transform_indices = @transform_1, window_bounds = array<i64: 16, 128>}, {transform_indices = @transform_2, window_bounds = array<i64: 1, 1>}]} {
    %c0_i32 = arith.constant 0 : i32
    %0 = arith.cmpi eq, %arg1, %c0_i32 : i32
    %1 = arith.extui %0 : i1 to i32
    %c0_i32_0 = arith.constant 0 : i32
    %2 = arith.cmpi ne, %1, %c0_i32_0 : i32
    scf.if %2 {
      %cst = arith.constant 0.000000e+00 : f32
      %13 = vector.broadcast %cst : f32 to vector<16x128xf32>
      %c0_10 = arith.constant 0 : index
      %c0_11 = arith.constant 0 : index
      %14 = vector.load %arg5[%c0_10, %c0_11] : memref<16x128xf32, #tpu.memory_space<vmem>>, vector<16x128xf32>
      tpu.vector_store %arg5[%c0_10, %c0_11], %13 {strides = array<i32>} : memref<16x128xf32, #tpu.memory_space<vmem>>, vector<16x128xf32>,
    } else {
    }
    %c0 = arith.constant 0 : index
    %c0_1 = arith.constant 0 : index
    %3 = vector.load %arg2[%c0, %c0_1] : memref<16x128xf32, #tpu.memory_space<vmem>>, vector<16x128xf32>
    %c0_2 = arith.constant 0 : index
    %c0_3 = arith.constant 0 : index
    %4 = vector.load %arg3[%c0_2, %c0_3] : memref<16x128xf32, #tpu.memory_space<vmem>>, vector<16x128xf32>
    %5 = arith.subf %3, %4 : vector<16x128xf32>
    %6 = math.absf %5 : vector<16x128xf32>
    %c0_4 = arith.constant 0 : index
    %c0_5 = arith.constant 0 : index
    %7 = vector.load %arg5[%c0_4, %c0_5] : memref<16x128xf32, #tpu.memory_space<vmem>>, vector<16x128xf32>
    %8 = arith.addf %7, %6 : vector<16x128xf32>
    %c0_6 = arith.constant 0 : index
    %c0_7 = arith.constant 0 : index
    %9 = vector.load %arg5[%c0_6, %c0_7] : memref<16x128xf32, #tpu.memory_space<vmem>>, vector<16x128xf32>
    tpu.vector_store %arg5[%c0_6, %c0_7], %8 {strides = array<i32>} : memref<16x128xf32, #tpu.memory_space<vmem>>, vector<16x128xf32>,
    %c0_i32_8 = arith.constant 0 : i32
    %10 = arith.cmpi eq, %arg1, %c0_i32_8 : i32
    %11 = arith.extui %10 : i1 to i32
    %c0_i32_9 = arith.constant 0 : i32
    %12 = arith.cmpi ne, %11, %c0_i32_9 : i32
    scf.if %12 {
      %c0_10 = arith.constant 0 : index
      %c0_11 = arith.constant 0 : index
      %13 = vector.load %arg5[%c0_10, %c0_11] : memref<16x128xf32, #tpu.memory_space<vmem>>, vector<16x128xf32>
      %14 = vector.shape_cast %13 : vector<16x128xf32> to vector<1x16x128xf32>
      %cst = arith.constant dense<0.000000e+00> : vector<1xf32>
      %15 = vector.multi_reduction <add>, %14, %cst [1, 2] : vector<1x16x128xf32> to vector<1xf32>
      %16 = vector.shape_cast %15 : vector<1xf32> to vector<1x1x1xf32>
      %17 = vector.extract %16[0, 0, 0] : f32 from vector<1x1x1xf32>
      %c0_12 = arith.constant 0 : index
      %c0_13 = arith.constant 0 : index
      %18 = memref.load %arg4[%c0_12, %c0_13] : memref<1x1xf32, #tpu.memory_space<smem>>
      memref.store %17, %arg4[%c0_12, %c0_13] : memref<1x1xf32, #tpu.memory_space<smem>>
    } else {
    }
    return
  }
  func.func @transform_0(%arg0: i32, %arg1: i32) -> (i32, i32) {
    %c1_i32 = arith.constant 1 : i32
    %0 = arith.muli %arg0, %c1_i32 : i32
    %1 = arith.addi %0, %arg1 : i32
    %c0_i32 = arith.constant 0 : i32
    %c0_i32_0 = arith.constant 0 : i32
    return %1, %c0_i32 : i32, i32
  }
  func.func @transform_1(%arg0: i32, %arg1: i32) -> (i32, i32) {
    %c1_i32 = arith.constant 1 : i32
    %0 = arith.muli %arg0, %c1_i32 : i32
    %1 = arith.addi %0, %arg1 : i32
    %c0_i32 = arith.constant 0 : i32
    %c0_i32_0 = arith.constant 0 : i32
    return %1, %c0_i32 : i32, i32
  }
  func.func @transform_2(%arg0: i32, %arg1: i32) -> (i32, i32) {
    %c0_i32 = arith.constant 0 : i32
    %c0_i32_0 = arith.constant 0 : i32
    return %arg0, %c0_i32 : i32, i32
  }
}

</mosaic_0001>

<llo_original>
// kernel: tpu_custom_call.1
$region0: #{tpu_custom_call.1}
  #allocation0 [shape = 'u32[]', space=smem, size = 0x4, offset = 0x4, fixed_abs, tag = 'smem constant byte address 0x4 - core index']
  #allocation1 [shape = 'u32[144,128]{1,0:T(1,128)}', space=vmem, size = 0x12000, scoped, tag = 'internal scratch']
  #allocation2 [shape = 'f32[16,128]{1,0:T(8,128)}', space=vmem, size = 0x2000, scoped, tag = 'scratch operand']
  %s0 = inlined_call_operand.hbm [shape: f32[16,128], index: 0, kind: input, shape index: {}]
  %s1 = inlined_call_operand.hbm [shape: f32[16,128], index: 1, kind: input, shape index: {}]
  %s2 = inlined_call_operand.hbm [shape: f32[1,1], index: 2, kind: output, shape index: {}]
  %s3 = sld [smem:[#allocation0]]
  $region34: #{tpu_custom_call.1} parent=0
    _
  %s5 = ssub.s32 1, %s3
  %s6 = scalar_select 0, %s5, %s3
  $region1: #{tpu_custom_call.1} parent=0
    #allocation3 [shape = 'u8[8192]{0}', space=vmem, size = 0x2000, scoped, tag = 'input window, operand 0, single buffered']
    #allocation4 [shape = 's32[1]{0}', space=sflag, size = 0x4, scoped, tag = 'scoped memory for tpu_custom_call.1']
    #allocation5 [shape = 's32[1]{0}', space=sflag, size = 0x4, scoped, tag = 'scoped memory for tpu_custom_call.1']
    #allocation6 [shape = 'u8[8192]{0}', space=vmem, size = 0x2000, scoped, tag = 'input window, operand 1, single buffered']
    #allocation7 [shape = 's32[1]{0}', space=sflag, size = 0x4, scoped, tag = 'scoped memory for tpu_custom_call.1']
    #allocation8 [shape = 'u8[512]{0}', space=smem, size = 0x200, scoped, tag = 'output window, operand 0, single buffered']
    %7 = vsyncpa [#allocation4], 0
    %8 = vsyncpa [#allocation7], 0
    %9 = vsyncpa [#allocation5], 0
    // Predicated region
    $region2: #{tpu_custom_call.1} parent=1 // pred_check
      _
    $region3: #{tpu_custom_call.1} parent=1 // pred_check_branch
      %11 = sbr.rel (0) target = $region5
    $region4: #{tpu_custom_call.1} parent=1 // pred_region
      %s12 = sadd.s32 0, 0
      %s13 = smul.u32 2, %s12
      %s15 = ssub.s32 256, 256
      %16 = vsyncadd [#allocation4], %s15
      %s17 = smul.addr %s13, 128
      %s18 = scalar_lea.hbm %s0, %s17
      %s19 = sshll.u32 [#allocation3], 4
      %s20 = int_to_ptr.vmem [resolvable:$true] %s19
      %25 = dma.hbm_to_vmem [thread:$0]  %s18, 256, %s20, [#allocation4], 128, 128, 8
    $region5: #{tpu_custom_call.1} parent=1 // pred_fallthru
      _
    // Predicated region
    $region6: #{tpu_custom_call.1} parent=1 // pred_check
      _
    $region7: #{tpu_custom_call.1} parent=1 // pred_check_branch
      %27 = sbr.rel (0) target = $region9
    $region8: #{tpu_custom_call.1} parent=1 // pred_region
      %s28 = sadd.s32 0, 0
      %s29 = smul.u32 2, %s28
      %s31 = ssub.s32 256, 256
      %32 = vsyncadd [#allocation7], %s31
      %s33 = smul.addr %s29, 128
      %s34 = scalar_lea.hbm %s1, %s33
      %s35 = sshll.u32 [#allocation6], 4
      %s36 = int_to_ptr.vmem [resolvable:$true] %s35
      %41 = dma.hbm_to_vmem [thread:$0]  %s34, 256, %s36, [#allocation7], 128, 128, 8
    $region9: #{tpu_custom_call.1} parent=1 // pred_fallthru
      _
    // Predicated region
    $region10: #{tpu_custom_call.1} parent=1 // pred_check
      _
    $region11: #{tpu_custom_call.1} parent=1 // pred_check_branch
      %43 = sbr.rel (0) target = $region13
    $region12: #{tpu_custom_call.1} parent=1 // pred_region
      %44 = dma.done [#allocation4], 256
    $region13: #{tpu_custom_call.1} parent=1 // pred_fallthru
      _
    // Predicated region
    $region14: #{tpu_custom_call.1} parent=1 // pred_check
      _
    $region15: #{tpu_custom_call.1} parent=1 // pred_check_branch
      %46 = sbr.rel (0) target = $region17
    $region16: #{tpu_custom_call.1} parent=1 // pred_region
      %47 = dma.done [#allocation7], 256
    $region17: #{tpu_custom_call.1} parent=1 // pred_fallthru
      _
    %s48 = sadd.s32 0, 0
    %s49 = smul.u32 2, %s48
    %s50 = sadd.s32 0, 0
    %s51 = smul.u32 2, %s50
    %p52 = scmp.eq.s32.totalorder 0, 0
    // Predicated region
    $region18: #{tpu_custom_call.1} parent=1 // pred_check
      %p53 = pneg %p52
    $region19: #{tpu_custom_call.1} parent=1 // pred_check_branch
      %55 = sbr.rel (%p53) target = $region21
    $region20: #{tpu_custom_call.1} parent=1 // pred_region
      %56 = vst [vmem:[#allocation2] sm:$0xff] 0.0
      %57 = vst [vmem:[#allocation2 + $0x8] sm:$0xff] 0.0
    $region21: #{tpu_custom_call.1} parent=1 // pred_fallthru
      _
    %v58 = vld [vmem:[#allocation3] sm:$0xff]
    %v59 = vld [vmem:[#allocation3 + $0x8] sm:$0xff]
    %v60 = vld [vmem:[#allocation6] sm:$0xff]
    %v61 = vld [vmem:[#allocation6 + $0x8] sm:$0xff]
    %v62 = vsub.f32 %v58, %v60
    %v63 = vsub.f32 %v59, %v61
    %v64 = vand.u32 2147483647, %v62
    %v65 = vand.u32 2147483647, %v63
    %v66 = vld [vmem:[#allocation2] sm:$0xff]
    %v67 = vld [vmem:[#allocation2 + $0x8] sm:$0xff]
    %v68 = vadd.f32 %v66, %v64
    %v69 = vadd.f32 %v67, %v65
    %70 = vst [vmem:[#allocation2] sm:$0xff] %v68
    %71 = vst [vmem:[#allocation2 + $0x8] sm:$0xff] %v69
    // Predicated region
    $region22: #{tpu_custom_call.1} parent=1 // pred_check
      %p72 = pneg %p52
    $region23: #{tpu_custom_call.1} parent=1 // pred_check_branch
      %74 = sbr.rel (%p72) target = $region25
    $region24: #{tpu_custom_call.1} parent=1 // pred_region
      %v75 = vld [vmem:[#allocation2] sm:$0xff]
      %v76 = vld [vmem:[#allocation2 + $0x8] sm:$0xff]
      %v77 = vadd.f32 %v75, %v76
      %78 = vadd.xlane.f32.xlu0 %v77
      %v79 = vpop.xlane.xlu0 %78
      %v80 = vrot.slane %v79, 4
      %v81 = vadd.f32 %v79, %v80
      %v82 = vrot.slane %v81, 2
      %v83 = vadd.f32 %v81, %v82
      %v84 = vrot.slane %v83, 1
      %v85 = vadd.f32 %v83, %v84
      %s86 = vtos %v85
      %s87 = scalar_lea.smem [#allocation8], 0
      %88 = sst [smem:[%s87]] %s86
    $region25: #{tpu_custom_call.1} parent=1 // pred_fallthru
      _
    // Predicated region
    $region26: #{tpu_custom_call.1} parent=1 // pred_check
      _
    $region27: #{tpu_custom_call.1} parent=1 // pred_check_branch
      %90 = sbr.rel (0) target = $region29
    $region28: #{tpu_custom_call.1} parent=1 // pred_region
      %s92 = ssub.s32 16, 16
      %93 = vsyncadd [#allocation5], %s92
      %96 = dma.smem_to_hbm [#allocation8], 16, %s2, [#allocation5]
    $region29: #{tpu_custom_call.1} parent=1 // pred_fallthru
      _
    // Predicated region
    $region30: #{tpu_custom_call.1} parent=1 // pred_check
      _
    $region31: #{tpu_custom_call.1} parent=1 // pred_check_branch
      %98 = sbr.rel (0) target = $region33
    $region32: #{tpu_custom_call.1} parent=1 // pred_region
      %99 = dma.done [#allocation5], 16
    $region33: #{tpu_custom_call.1} parent=1 // pred_fallthru
      _
    %100 = sfence
    %101 = vsyncpa [#allocation4], 1
    %102 = vsyncpa [#allocation7], 1
    %103 = vsyncpa [#allocation5], 1

</llo_original>
